<compile_context>
chip_gen: v7x
topology: tpu7x:2x2x1
jax: 0.10.0
libtpu: 0.0.40
codegen_flags: <defaults>
</compile_context>

<pallas_src>
import math

import jax
import jax.numpy as jnp
from jax.experimental import pallas as pl
from jax.experimental.pallas import tpu as pltpu

_SHIFT = math.log(2.0)


def _shifted_softplus_kernel(x_ref, o_ref):
    # Upcast for numerically stable softplus: max(x, 0) + log1p(exp(-|x|)).
    x = x_ref[...].astype(jnp.float32)
    sp = jnp.maximum(x, 0.0) + jnp.log1p(jnp.exp(-jnp.abs(x)))
    o_ref[...] = (sp - _SHIFT).astype(o_ref.dtype)


def shifted_softplus(x, *, tile_rows=1024, lane=512):
    """Elementwise softplus(x) - log(2) via a Pallas TPU kernel."""
    orig_shape = x.shape
    orig_dtype = x.dtype
    n = x.size

    x_flat = jnp.ravel(x)

    # Pad only to a multiple of the lane width (not tile_rows * lane), and
    # only when actually needed.  Pad value 0 -> softplus(0) - log2 = 0, and
    # the padded tail is sliced off below, so padding is numerically harmless.
    pad = (-n) % lane
    if pad:
        x_flat = jnp.pad(x_flat, (0, pad))
    rows = (n + pad) // lane
    x2d = x_flat.reshape(rows, lane)

    # Block rows: either the full tile (multiple of 8) or the whole array
    # (full-extent block is always legal).  Last partial block is masked.
    block_rows = min(tile_rows, rows)
    grid = (pl.cdiv(rows, block_rows),)

    out2d = pl.pallas_call(
        _shifted_softplus_kernel,
        out_shape=jax.ShapeDtypeStruct((rows, lane), orig_dtype),
        grid_spec=pl.GridSpec(
            grid=grid,
            in_specs=[pl.BlockSpec((block_rows, lane), lambda i: (i, 0))],
            out_specs=pl.BlockSpec((block_rows, lane), lambda i: (i, 0)),
        ),
        compiler_params=pltpu.CompilerParams(
            dimension_semantics=("parallel",),
        ),
    )(x2d)

    out_flat = out2d.reshape(-1)
    if pad:
        out_flat = out_flat[:n]
    return out_flat.reshape(orig_shape)


if __name__ == "__main__":
    key = jax.random.PRNGKey(0)
    # Shape consistent with a typical NCHW activation: batch=2, channels=4, 16x16
    x = jax.random.normal(key, (2, 4, 16, 16), dtype=jnp.float32) * 3.0

    y = shifted_softplus(x)
    jax.block_until_ready(y)

    # Reference check in plain JAX
    ref = jax.nn.softplus(x) - math.log(2.0)
    assert y.shape == x.shape and y.dtype == x.dtype
    assert jnp.max(jnp.abs(y - ref)) < 1e-5

    # Also exercise a non-aligned size and a bf16 path (kernel upcasts internally).
    x2 = jax.random.normal(jax.random.PRNGKey(1), (3, 7, 13), dtype=jnp.bfloat16) * 3.0
    y2 = shifted_softplus(x2)
    jax.block_until_ready(y2)
    ref2 = (jax.nn.softplus(x2.astype(jnp.float32)) - math.log(2.0)).astype(jnp.bfloat16)
    assert y2.shape == x2.shape and y2.dtype == x2.dtype
    assert jnp.max(jnp.abs(y2.astype(jnp.float32) - ref2.astype(jnp.float32))) < 2e-2

    print("KERNEL_OK")
</pallas_src>

<mosaic_0001>
module attributes {stable_mosaic.version = 11 : i64} {
  func.func @_shifted_softplus_kernel(%arg0: i32, %arg1: memref<4x512xf32, #tpu.memory_space<vmem>>, %arg2: memref<4x512xf32, #tpu.memory_space<vmem>>) attributes {dimension_semantics = [#tpu.dimension_semantics<parallel>], iteration_bounds = array<i64: 1>, scalar_prefetch = 0 : i64, scratch_operands = 0 : i64, tpu.core_type = #tpu.core_type<tc>, window_params = [{transform_indices = @transform_0, window_bounds = array<i64: 4, 512>}, {transform_indices = @transform_1, window_bounds = array<i64: 4, 512>}]} {
    %c0 = arith.constant 0 : index
    %c0_0 = arith.constant 0 : index
    %0 = vector.load %arg1[%c0, %c0_0] : memref<4x512xf32, #tpu.memory_space<vmem>>, vector<4x512xf32>
    %cst = arith.constant 0.000000e+00 : f32
    %1 = vector.broadcast %cst : f32 to vector<4x512xf32>
    %2 = arith.maximumf %0, %1 : vector<4x512xf32>
    %3 = math.absf %0 : vector<4x512xf32>
    %cst_1 = arith.constant 0.000000e+00 : f32
    %4 = vector.broadcast %cst_1 : f32 to vector<4x512xf32>
    %5 = arith.subf %4, %3 : vector<4x512xf32>
    %6 = math.exp %5 : vector<4x512xf32>
    %7 = math.log1p %6 : vector<4x512xf32>
    %8 = arith.addf %2, %7 : vector<4x512xf32>
    %cst_2 = arith.constant 0.693147182 : f32
    %9 = vector.broadcast %cst_2 : f32 to vector<4x512xf32>
    %10 = arith.subf %8, %9 : vector<4x512xf32>
    %c0_3 = arith.constant 0 : index
    %c0_4 = arith.constant 0 : index
    %11 = vector.load %arg2[%c0_3, %c0_4] : memref<4x512xf32, #tpu.memory_space<vmem>>, vector<4x512xf32>
    tpu.vector_store %arg2[%c0_3, %c0_4], %10 {strides = array<i32>} : memref<4x512xf32, #tpu.memory_space<vmem>>, vector<4x512xf32>,
    return
  }
  func.func @transform_0(%arg0: i32) -> (i32, i32) {
    %c0_i32 = arith.constant 0 : i32
    %c0_i32_0 = arith.constant 0 : i32
    return %arg0, %c0_i32 : i32, i32
  }
  func.func @transform_1(%arg0: i32) -> (i32, i32) {
    %c0_i32 = arith.constant 0 : i32
    %c0_i32_0 = arith.constant 0 : i32
    return %arg0, %c0_i32 : i32, i32
  }
}

</mosaic_0001>

<llo_original>
// kernel: tpu_custom_call.1
$region0: #{tpu_custom_call.1}
  #allocation0 [shape = 'u32[]', space=smem, size = 0x4, offset = 0x4, fixed_abs, tag = 'smem constant byte address 0x4 - core index']
  #allocation1 [shape = 'u32[144,128]{1,0:T(1,128)}', space=vmem, size = 0x12000, scoped, tag = 'internal scratch']
  %s0 = inlined_call_operand.hbm [shape: f32[4,512], index: 0, kind: input, shape index: {}]
  %s1 = inlined_call_operand.hbm [shape: f32[4,512], index: 1, kind: output, shape index: {}]
  %s2 = sld [smem:[#allocation0]]
  $region18: #{tpu_custom_call.1} parent=0
    _
  %s4 = ssub.s32 1, %s2
  %s5 = scalar_select 0, %s4, %s2
  $region1: #{tpu_custom_call.1} parent=0
    #allocation2 [shape = 'u8[8192]{0}', space=vmem, size = 0x2000, scoped, tag = 'input window, operand 0, single buffered']
    #allocation3 [shape = 's32[1]{0}', space=sflag, size = 0x4, scoped, tag = 'scoped memory for tpu_custom_call.1']
    #allocation4 [shape = 's32[1]{0}', space=sflag, size = 0x4, scoped, tag = 'scoped memory for tpu_custom_call.1']
    #allocation5 [shape = 'u8[8192]{0}', space=vmem, size = 0x2000, scoped, tag = 'output window, operand 0, single buffered']
    %6 = vsyncpa [#allocation3], 0
    %7 = vsyncpa [#allocation4], 0
    // Predicated region
    $region2: #{tpu_custom_call.1} parent=1 // pred_check
      _
    $region3: #{tpu_custom_call.1} parent=1 // pred_check_branch
      %9 = sbr.rel (0) target = $region5
    $region4: #{tpu_custom_call.1} parent=1 // pred_region
      %s11 = ssub.s32 256, 256
      %12 = vsyncadd [#allocation3], %s11
      %s14 = sshll.u32 [#allocation2], 4
      %s15 = int_to_ptr.vmem [resolvable:$true] %s14
      %17 = dma.hbm_to_vmem [thread:$0]  %s0, 256, %s15, [#allocation3]
    $region5: #{tpu_custom_call.1} parent=1 // pred_fallthru
      _
    // Predicated region
    $region6: #{tpu_custom_call.1} parent=1 // pred_check
      _
    $region7: #{tpu_custom_call.1} parent=1 // pred_check_branch
      %19 = sbr.rel (0) target = $region9
    $region8: #{tpu_custom_call.1} parent=1 // pred_region
      %20 = dma.done [#allocation3], 256
    $region9: #{tpu_custom_call.1} parent=1 // pred_fallthru
      _
    %v21 = vld [vmem:[#allocation2] sm:$0xff]
    %v22 = vld [vmem:[#allocation2 + $0x8] sm:$0xff]
    %v23 = vmax.f32 %v21, 0.0
    %v24 = vmax.f32 %v22, 0.0
    %v25 = vand.u32 2147483647, %v21
    %v26 = vand.u32 2147483647, %v22
    %v27 = vsub.f32 0.0, %v25
    %v28 = vsub.f32 0.0, %v26
    %v29 = vmul.f32 %v27, 1.442695
    %v30 = vpow.pop %v29
    %v31 = vmul.f32 %v28, 1.442695
    %v32 = vpow.pop %v31
    %v33 = vadd.f32 %v30, 1.0
    %v34 = vlog2.pop %v33
    %v35 = vmul.f32 %v34, 0.6931472
    %v36 = vmul.f32 -0.5, %v30
    %v37 = vadd.f32 %v36, 1.0
    %v38 = vmul.f32 %v37, %v30
    %v39 = vand.u32 2147483647, %v30
    %vm40 = vcmp.lt.f32.partialorder %v39, 0.0004427343
    %v41 = vsel %vm40, %v38, %v35
    %v42 = vadd.f32 %v32, 1.0
    %v43 = vlog2.pop %v42
    %v44 = vmul.f32 %v43, 0.6931472
    %v45 = vmul.f32 -0.5, %v32
    %v46 = vadd.f32 %v45, 1.0
    %v47 = vmul.f32 %v46, %v32
    %v48 = vand.u32 2147483647, %v32
    %vm49 = vcmp.lt.f32.partialorder %v48, 0.0004427343
    %v50 = vsel %vm49, %v47, %v44
    %v51 = vadd.f32 %v23, %v41
    %v52 = vadd.f32 %v24, %v50
    %v53 = vsub.f32 %v51, 0.6931472
    %v54 = vsub.f32 %v52, 0.6931472
    %55 = vst [vmem:[#allocation5] sm:$0xff] %v53
    %56 = vst [vmem:[#allocation5 + $0x8] sm:$0xff] %v54
    // Predicated region
    $region10: #{tpu_custom_call.1} parent=1 // pred_check
      _
    $region11: #{tpu_custom_call.1} parent=1 // pred_check_branch
      %58 = sbr.rel (0) target = $region13
    $region12: #{tpu_custom_call.1} parent=1 // pred_region
      %s60 = ssub.s32 256, 256
      %61 = vsyncadd [#allocation4], %s60
      %s63 = sshll.u32 [#allocation5], 4
      %s64 = int_to_ptr.vmem [resolvable:$true] %s63
      %66 = dma.vmem_to_hbm [thread:$0]  %s64, 256, %s1, [#allocation4]
    $region13: #{tpu_custom_call.1} parent=1 // pred_fallthru
      _
    // Predicated region
    $region14: #{tpu_custom_call.1} parent=1 // pred_check
      _
    $region15: #{tpu_custom_call.1} parent=1 // pred_check_branch
      %68 = sbr.rel (0) target = $region17
    $region16: #{tpu_custom_call.1} parent=1 // pred_region
      %69 = dma.done [#allocation4], 256
    $region17: #{tpu_custom_call.1} parent=1 // pred_fallthru
      _
    %70 = vsyncpa [#allocation3], 1
    %71 = vsyncpa [#allocation4], 1

</llo_original>
